<compile_context>
chip_gen: v5e
topology: v5e:2x2
jax: 0.10.0
libtpu: 0.0.40
codegen_flags: <defaults>
</compile_context>

<pallas_src>
import functools

import jax
import jax.numpy as jnp
from jax.experimental import pallas as pl
from jax.experimental.pallas import tpu as pltpu


# ----------------------------- Fused Pallas kernel -------------------------- #

def _fused_mha_kernel(x_ref, wqkv_ref, bqkv_ref, wout_ref, bout_ref, o_ref,
                      *, heads, head_size, scale, mxu_dtype):
    """Whole batch in one step: qkv proj -> per-head SDPA -> out proj."""
    B, N, D = x_ref.shape
    hhs = heads * head_size
    exact = jnp.dtype(mxu_dtype) == jnp.dtype(jnp.float32)

    # Merge batch+token rows so every projection is one (B*N, ...) MXU pass.
    x2 = x_ref[...].reshape(B * N, D)

    # --- qkv = x @ W_qkv + b_qkv  (weights arrive pre-cast to mxu_dtype) ---
    qkv = jnp.dot(x2.astype(mxu_dtype), wqkv_ref[...],
                  preferred_element_type=jnp.float32) + bqkv_ref[...]   # (BN, 3*hhs) f32

    # chunk(3, dim=-1); fold 1/sqrt(Hs) into q so the scale is O(BN*hhs).
    q_all = qkv[:, 0 * hhs:1 * hhs] * scale
    k_all = qkv[:, 1 * hhs:2 * hhs]
    v_all = qkv[:, 2 * hhs:3 * hhs]

    # --- per-head scaled dot-product attention, outputs kept in vregs ---
    head_outs = []
    for h in range(heads):                       # static unroll; no per-head grid steps
        lo = h * head_size
        qh = q_all[:, lo:lo + head_size].reshape(B, N, head_size).astype(mxu_dtype)
        kh = k_all[:, lo:lo + head_size].reshape(B, N, head_size).astype(mxu_dtype)
        vh = v_all[:, lo:lo + head_size].reshape(B, N, head_size).astype(mxu_dtype)

        s = jnp.einsum('bqd,bkd->bqk', qh, kh,
                       preferred_element_type=jnp.float32)              # (B, N, N) f32
        s = s - jnp.max(s, axis=-1, keepdims=True)
        p = jnp.exp(s)                                                  # f32 softmax
        denom = jnp.sum(p, axis=-1, keepdims=True)
        if exact:
            p = p / denom                                               # fp32-parity mode
        else:
            p = p * pl.reciprocal(denom, approx=True)                   # EUP slot, ~free

        head_outs.append(jnp.einsum('bqk,bkd->bqd', p.astype(mxu_dtype), vh,
                                    preferred_element_type=jnp.float32))  # (B, N, Hs)

    attn = jnp.concatenate(head_outs, axis=-1).reshape(B * N, hhs)      # in-register assembly

    # --- out = attn @ W_out + b_out;  Dropout(0.5) is identity at inference ---
    y = jnp.dot(attn.astype(mxu_dtype), wout_ref[...],
                preferred_element_type=jnp.float32) + bout_ref[...]     # (BN, D)
    o_ref[...] = y.reshape(B, N, D).astype(o_ref.dtype)


# ----------------------------- Module wrapper ------------------------------- #

def multi_head_attention(x, params, heads, head_size, *, mxu_dtype=jnp.bfloat16):
    """x: (B, N, D) -> (B, N, D).  One fused pallas_call, single grid step."""
    B, N, D = x.shape
    hhs = heads * head_size
    scale = 1.0 / float(head_size) ** 0.5

    # Pre-cast weights once in the wrapper (no per-step converts, half the DMA).
    w_qkv = params["w_qkv"].astype(mxu_dtype)
    w_out = params["w_out"].astype(mxu_dtype)
    b_qkv = params["b_qkv"].reshape(1, 3 * hhs).astype(jnp.float32)
    b_out = params["b_out"].reshape(1, D).astype(jnp.float32)

    flops = (2 * B * N * D * 3 * hhs                    # qkv projection
             + 4 * B * heads * N * N * head_size        # q@k^T and p@v
             + 2 * B * N * hhs * D)                     # output projection
    transcendentals = B * heads * N * (N + 1)           # exp + approx reciprocal
    bytes_accessed = (4 * (x.size + b_qkv.size + b_out.size + B * N * D)
                      + w_qkv.dtype.itemsize * w_qkv.size
                      + w_out.dtype.itemsize * w_out.size)

    kernel = functools.partial(_fused_mha_kernel, heads=heads,
                               head_size=head_size, scale=scale,
                               mxu_dtype=mxu_dtype)
    return pl.pallas_call(
        kernel,
        grid=(1,),                                       # whole problem in one step
        out_shape=jax.ShapeDtypeStruct((B, N, D), jnp.float32),
        in_specs=[
            pl.BlockSpec((B, N, D), lambda i: (0, 0, 0)),     # x: full batch resident
            pl.BlockSpec((D, 3 * hhs), lambda i: (0, 0)),     # weights stay resident
            pl.BlockSpec((1, 3 * hhs), lambda i: (0, 0)),
            pl.BlockSpec((hhs, D), lambda i: (0, 0)),
            pl.BlockSpec((1, D), lambda i: (0, 0)),
        ],
        out_specs=pl.BlockSpec((B, N, D), lambda i: (0, 0, 0)),
        compiler_params=pltpu.CompilerParams(
            dimension_semantics=("arbitrary",)),
        cost_estimate=pl.CostEstimate(flops=flops,
                                      transcendentals=transcendentals,
                                      bytes_accessed=bytes_accessed),
    )(x, w_qkv, b_qkv, w_out, b_out)


def init_params(key, input_size, heads, head_size):
    """Deterministic parameter init (PyTorch-Linear-style uniform bounds)."""
    k1, k2, k3, k4 = jax.random.split(key, 4)
    qkv_out = heads * head_size * 3
    lim_in = 1.0 / (input_size ** 0.5)
    lim_hd = 1.0 / ((heads * head_size) ** 0.5)
    return {
        "w_qkv": jax.random.uniform(k1, (input_size, qkv_out),
                                    jnp.float32, -lim_in, lim_in),
        "b_qkv": jax.random.uniform(k2, (qkv_out,),
                                    jnp.float32, -lim_in, lim_in),
        "w_out": jax.random.uniform(k3, (heads * head_size, input_size),
                                    jnp.float32, -lim_hd, lim_hd),
        "b_out": jax.random.uniform(k4, (input_size,),
                                    jnp.float32, -lim_hd, lim_hd),
    }


# --------------------------------- main ------------------------------------- #

if __name__ == "__main__":
    batch, num_patches, input_size = 2, 8, 32
    heads, head_size = 4, 8

    key = jax.random.PRNGKey(0)
    kx, kp = jax.random.split(key)
    x = jax.random.normal(kx, (batch, num_patches, input_size), jnp.float32)
    params = init_params(kp, input_size, heads, head_size)

    y = multi_head_attention(x, params, heads, head_size)
    jax.block_until_ready(y)
    assert y.shape == (batch, num_patches, input_size)
    assert y.dtype == jnp.float32
    assert bool(jnp.all(jnp.isfinite(y)))
    print("KERNEL_OK")
</pallas_src>

<mosaic_0001>
module attributes {stable_mosaic.version = 11 : i64} {
  func.func @_fused_mha_kernel(%arg0: i32, %arg1: memref<2x8x32xf32, #tpu.memory_space<vmem>>, %arg2: memref<32x96xbf16, #tpu.memory_space<vmem>>, %arg3: memref<1x96xf32, #tpu.memory_space<vmem>>, %arg4: memref<32x32xbf16, #tpu.memory_space<vmem>>, %arg5: memref<1x32xf32, #tpu.memory_space<vmem>>, %arg6: memref<2x8x32xf32, #tpu.memory_space<vmem>>) attributes {dimension_semantics = [#tpu.dimension_semantics<arbitrary>], iteration_bounds = array<i64: 1>, scalar_prefetch = 0 : i64, scratch_operands = 0 : i64, tpu.core_type = #tpu.core_type<tc>, window_params = [{pipeline_mode = #tpu.pipeline_mode<synchronous>, transform_indices = @transform_0, window_bounds = array<i64: 2, 8, 32>}, {pipeline_mode = #tpu.pipeline_mode<synchronous>, transform_indices = @transform_1, window_bounds = array<i64: 32, 96>}, {pipeline_mode = #tpu.pipeline_mode<synchronous>, transform_indices = @transform_2, window_bounds = array<i64: 1, 96>}, {pipeline_mode = #tpu.pipeline_mode<synchronous>, transform_indices = @transform_3, window_bounds = array<i64: 32, 32>}, {pipeline_mode = #tpu.pipeline_mode<synchronous>, transform_indices = @transform_4, window_bounds = array<i64: 1, 32>}, {pipeline_mode = #tpu.pipeline_mode<synchronous>, transform_indices = @transform_5, window_bounds = array<i64: 2, 8, 32>}]} {
    %c0 = arith.constant 0 : index
    %c0_0 = arith.constant 0 : index
    %c0_1 = arith.constant 0 : index
    %0 = vector.load %arg1[%c0, %c0_0, %c0_1] : memref<2x8x32xf32, #tpu.memory_space<vmem>>, vector<2x8x32xf32>
    %1 = vector.shape_cast %0 : vector<2x8x32xf32> to vector<16x32xf32>
    %2 = arith.truncf %1 : vector<16x32xf32> to vector<16x32xbf16>
    %c0_2 = arith.constant 0 : index
    %c0_3 = arith.constant 0 : index
    %3 = vector.load %arg2[%c0_2, %c0_3] : memref<32x96xbf16, #tpu.memory_space<vmem>>, vector<32x96xbf16>
    %cst = arith.constant dense<0.000000e+00> : vector<16x96xf32>
    %4 = tpu.matmul %2, %3, %cst {dimension_numbers = #tpu.dot_dimension_numbers<[1], [0], [0], [1], [0, 0, 1, 1], [], []>} : vector<16x32xbf16>, vector<32x96xbf16>, vector<16x96xf32> -> vector<16x96xf32>
    %c0_4 = arith.constant 0 : index
    %c0_5 = arith.constant 0 : index
    %5 = vector.load %arg3[%c0_4, %c0_5] : memref<1x96xf32, #tpu.memory_space<vmem>>, vector<1x96xf32>
    %6 = vector.broadcast %5 : vector<1x96xf32> to vector<16x96xf32>
    %7 = arith.addf %4, %6 : vector<16x96xf32>
    %8 = vector.extract_strided_slice %7 {offsets = [0, 0], sizes = [16, 32], strides = [1, 1]} : vector<16x96xf32> to vector<16x32xf32>
    %cst_6 = arith.constant 0.353553385 : f32
    %9 = vector.broadcast %cst_6 : f32 to vector<16x32xf32>
    %10 = arith.mulf %8, %9 : vector<16x32xf32>
    %11 = vector.extract_strided_slice %7 {offsets = [0, 32], sizes = [16, 32], strides = [1, 1]} : vector<16x96xf32> to vector<16x32xf32>
    %12 = vector.extract_strided_slice %7 {offsets = [0, 64], sizes = [16, 32], strides = [1, 1]} : vector<16x96xf32> to vector<16x32xf32>
    %13 = vector.extract_strided_slice %10 {offsets = [0, 0], sizes = [16, 8], strides = [1, 1]} : vector<16x32xf32> to vector<16x8xf32>
    %14 = vector.shape_cast %13 : vector<16x8xf32> to vector<2x8x8xf32>
    %15 = arith.truncf %14 : vector<2x8x8xf32> to vector<2x8x8xbf16>
    %16 = vector.extract_strided_slice %11 {offsets = [0, 0], sizes = [16, 8], strides = [1, 1]} : vector<16x32xf32> to vector<16x8xf32>
    %17 = vector.shape_cast %16 : vector<16x8xf32> to vector<2x8x8xf32>
    %18 = arith.truncf %17 : vector<2x8x8xf32> to vector<2x8x8xbf16>
    %19 = vector.extract_strided_slice %12 {offsets = [0, 0], sizes = [16, 8], strides = [1, 1]} : vector<16x32xf32> to vector<16x8xf32>
    %20 = vector.shape_cast %19 : vector<16x8xf32> to vector<2x8x8xf32>
    %21 = arith.truncf %20 : vector<2x8x8xf32> to vector<2x8x8xbf16>
    "tpu.trace_start"() <{level = 10 : i32, message = "bqd,bkd->bqk"}> : () -> ()
    %cst_7 = arith.constant dense<0.000000e+00> : vector<2x8x8xf32>
    %22 = tpu.matmul %15, %18, %cst_7 {dimension_numbers = #tpu.dot_dimension_numbers<[2], [2], [1], [1], [0, 0, 0, 1, 1, 1], [0], [0]>} : vector<2x8x8xbf16>, vector<2x8x8xbf16>, vector<2x8x8xf32> -> vector<2x8x8xf32>
    "tpu.trace_stop"() : () -> ()
    %cst_8 = arith.constant dense<0xFF800000> : vector<2x8xf32>
    %23 = vector.multi_reduction <maximumf>, %22, %cst_8 [2] : vector<2x8x8xf32> to vector<2x8xf32>
    %24 = vector.shape_cast %23 : vector<2x8xf32> to vector<2x8x1xf32>
    %25 = vector.broadcast %24 : vector<2x8x1xf32> to vector<2x8x8xf32>
    %26 = arith.subf %22, %25 : vector<2x8x8xf32>
    %27 = math.exp %26 : vector<2x8x8xf32>
    %cst_9 = arith.constant dense<0.000000e+00> : vector<2x8xf32>
    %28 = vector.multi_reduction <add>, %27, %cst_9 [2] : vector<2x8x8xf32> to vector<2x8xf32>
    %29 = vector.shape_cast %28 : vector<2x8xf32> to vector<2x8x1xf32>
    %30 = tpu.reciprocal %29 {approx = true} : vector<2x8x1xf32> -> vector<2x8x1xf32>
    %31 = vector.broadcast %30 : vector<2x8x1xf32> to vector<2x8x8xf32>
    %32 = arith.mulf %27, %31 : vector<2x8x8xf32>
    %33 = arith.truncf %32 : vector<2x8x8xf32> to vector<2x8x8xbf16>
    "tpu.trace_start"() <{level = 10 : i32, message = "bqk,bkd->bqd"}> : () -> ()
    %cst_10 = arith.constant dense<0.000000e+00> : vector<2x8x8xf32>
    %34 = tpu.matmul %33, %21, %cst_10 {dimension_numbers = #tpu.dot_dimension_numbers<[2], [1], [1], [2], [0, 0, 0, 1, 1, 2], [0], [0]>} : vector<2x8x8xbf16>, vector<2x8x8xbf16>, vector<2x8x8xf32> -> vector<2x8x8xf32>
    "tpu.trace_stop"() : () -> ()
    %35 = vector.extract_strided_slice %10 {offsets = [0, 8], sizes = [16, 8], strides = [1, 1]} : vector<16x32xf32> to vector<16x8xf32>
    %36 = vector.shape_cast %35 : vector<16x8xf32> to vector<2x8x8xf32>
    %37 = arith.truncf %36 : vector<2x8x8xf32> to vector<2x8x8xbf16>
    %38 = vector.extract_strided_slice %11 {offsets = [0, 8], sizes = [16, 8], strides = [1, 1]} : vector<16x32xf32> to vector<16x8xf32>
    %39 = vector.shape_cast %38 : vector<16x8xf32> to vector<2x8x8xf32>
    %40 = arith.truncf %39 : vector<2x8x8xf32> to vector<2x8x8xbf16>
    %41 = vector.extract_strided_slice %12 {offsets = [0, 8], sizes = [16, 8], strides = [1, 1]} : vector<16x32xf32> to vector<16x8xf32>
    %42 = vector.shape_cast %41 : vector<16x8xf32> to vector<2x8x8xf32>
    %43 = arith.truncf %42 : vector<2x8x8xf32> to vector<2x8x8xbf16>
    "tpu.trace_start"() <{level = 10 : i32, message = "bqd,bkd->bqk"}> : () -> ()
    %cst_11 = arith.constant dense<0.000000e+00> : vector<2x8x8xf32>
    %44 = tpu.matmul %37, %40, %cst_11 {dimension_numbers = #tpu.dot_dimension_numbers<[2], [2], [1], [1], [0, 0, 0, 1, 1, 1], [0], [0]>} : vector<2x8x8xbf16>, vector<2x8x8xbf16>, vector<2x8x8xf32> -> vector<2x8x8xf32>
    "tpu.trace_stop"() : () -> ()
    %cst_12 = arith.constant dense<0xFF800000> : vector<2x8xf32>
    %45 = vector.multi_reduction <maximumf>, %44, %cst_12 [2] : vector<2x8x8xf32> to vector<2x8xf32>
    %46 = vector.shape_cast %45 : vector<2x8xf32> to vector<2x8x1xf32>
    %47 = vector.broadcast %46 : vector<2x8x1xf32> to vector<2x8x8xf32>
    %48 = arith.subf %44, %47 : vector<2x8x8xf32>
    %49 = math.exp %48 : vector<2x8x8xf32>
    %cst_13 = arith.constant dense<0.000000e+00> : vector<2x8xf32>
    %50 = vector.multi_reduction <add>, %49, %cst_13 [2] : vector<2x8x8xf32> to vector<2x8xf32>
    %51 = vector.shape_cast %50 : vector<2x8xf32> to vector<2x8x1xf32>
    %52 = tpu.reciprocal %51 {approx = true} : vector<2x8x1xf32> -> vector<2x8x1xf32>
    %53 = vector.broadcast %52 : vector<2x8x1xf32> to vector<2x8x8xf32>
    %54 = arith.mulf %49, %53 : vector<2x8x8xf32>
    %55 = arith.truncf %54 : vector<2x8x8xf32> to vector<2x8x8xbf16>
    "tpu.trace_start"() <{level = 10 : i32, message = "bqk,bkd->bqd"}> : () -> ()
    %cst_14 = arith.constant dense<0.000000e+00> : vector<2x8x8xf32>
    %56 = tpu.matmul %55, %43, %cst_14 {dimension_numbers = #tpu.dot_dimension_numbers<[2], [1], [1], [2], [0, 0, 0, 1, 1, 2], [0], [0]>} : vector<2x8x8xbf16>, vector<2x8x8xbf16>, vector<2x8x8xf32> -> vector<2x8x8xf32>
    "tpu.trace_stop"() : () -> ()
    %57 = vector.extract_strided_slice %10 {offsets = [0, 16], sizes = [16, 8], strides = [1, 1]} : vector<16x32xf32> to vector<16x8xf32>
    %58 = vector.shape_cast %57 : vector<16x8xf32> to vector<2x8x8xf32>
    %59 = arith.truncf %58 : vector<2x8x8xf32> to vector<2x8x8xbf16>
    %60 = vector.extract_strided_slice %11 {offsets = [0, 16], sizes = [16, 8], strides = [1, 1]} : vector<16x32xf32> to vector<16x8xf32>
    %61 = vector.shape_cast %60 : vector<16x8xf32> to vector<2x8x8xf32>
    %62 = arith.truncf %61 : vector<2x8x8xf32> to vector<2x8x8xbf16>
    %63 = vector.extract_strided_slice %12 {offsets = [0, 16], sizes = [16, 8], strides = [1, 1]} : vector<16x32xf32> to vector<16x8xf32>
    %64 = vector.shape_cast %63 : vector<16x8xf32> to vector<2x8x8xf32>
    %65 = arith.truncf %64 : vector<2x8x8xf32> to vector<2x8x8xbf16>
    "tpu.trace_start"() <{level = 10 : i32, message = "bqd,bkd->bqk"}> : () -> ()
    %cst_15 = arith.constant dense<0.000000e+00> : vector<2x8x8xf32>
    %66 = tpu.matmul %59, %62, %cst_15 {dimension_numbers = #tpu.dot_dimension_numbers<[2], [2], [1], [1], [0, 0, 0, 1, 1, 1], [0], [0]>} : vector<2x8x8xbf16>, vector<2x8x8xbf16>, vector<2x8x8xf32> -> vector<2x8x8xf32>
    "tpu.trace_stop"() : () -> ()
    %cst_16 = arith.constant dense<0xFF800000> : vector<2x8xf32>
    %67 = vector.multi_reduction <maximumf>, %66, %cst_16 [2] : vector<2x8x8xf32> to vector<2x8xf32>
    %68 = vector.shape_cast %67 : vector<2x8xf32> to vector<2x8x1xf32>
    %69 = vector.broadcast %68 : vector<2x8x1xf32> to vector<2x8x8xf32>
    %70 = arith.subf %66, %69 : vector<2x8x8xf32>
    %71 = math.exp %70 : vector<2x8x8xf32>
    %cst_17 = arith.constant dense<0.000000e+00> : vector<2x8xf32>
    %72 = vector.multi_reduction <add>, %71, %cst_17 [2] : vector<2x8x8xf32> to vector<2x8xf32>
    %73 = vector.shape_cast %72 : vector<2x8xf32> to vector<2x8x1xf32>
    %74 = tpu.reciprocal %73 {approx = true} : vector<2x8x1xf32> -> vector<2x8x1xf32>
    %75 = vector.broadcast %74 : vector<2x8x1xf32> to vector<2x8x8xf32>
    %76 = arith.mulf %71, %75 : vector<2x8x8xf32>
    %77 = arith.truncf %76 : vector<2x8x8xf32> to vector<2x8x8xbf16>
    "tpu.trace_start"() <{level = 10 : i32, message = "bqk,bkd->bqd"}> : () -> ()
    %cst_18 = arith.constant dense<0.000000e+00> : vector<2x8x8xf32>
    %78 = tpu.matmul %77, %65, %cst_18 {dimension_numbers = #tpu.dot_dimension_numbers<[2], [1], [1], [2], [0, 0, 0, 1, 1, 2], [0], [0]>} : vector<2x8x8xbf16>, vector<2x8x8xbf16>, vector<2x8x8xf32> -> vector<2x8x8xf32>
    "tpu.trace_stop"() : () -> ()
    %79 = vector.extract_strided_slice %10 {offsets = [0, 24], sizes = [16, 8], strides = [1, 1]} : vector<16x32xf32> to vector<16x8xf32>
    %80 = vector.shape_cast %79 : vector<16x8xf32> to vector<2x8x8xf32>
    %81 = arith.truncf %80 : vector<2x8x8xf32> to vector<2x8x8xbf16>
    %82 = vector.extract_strided_slice %11 {offsets = [0, 24], sizes = [16, 8], strides = [1, 1]} : vector<16x32xf32> to vector<16x8xf32>
    %83 = vector.shape_cast %82 : vector<16x8xf32> to vector<2x8x8xf32>
    %84 = arith.truncf %83 : vector<2x8x8xf32> to vector<2x8x8xbf16>
    %85 = vector.extract_strided_slice %12 {offsets = [0, 24], sizes = [16, 8], strides = [1, 1]} : vector<16x32xf32> to vector<16x8xf32>
    %86 = vector.shape_cast %85 : vector<16x8xf32> to vector<2x8x8xf32>
    %87 = arith.truncf %86 : vector<2x8x8xf32> to vector<2x8x8xbf16>
    "tpu.trace_start"() <{level = 10 : i32, message = "bqd,bkd->bqk"}> : () -> ()
    %cst_19 = arith.constant dense<0.000000e+00> : vector<2x8x8xf32>
    %88 = tpu.matmul %81, %84, %cst_19 {dimension_numbers = #tpu.dot_dimension_numbers<[2], [2], [1], [1], [0, 0, 0, 1, 1, 1], [0], [0]>} : vector<2x8x8xbf16>, vector<2x8x8xbf16>, vector<2x8x8xf32> -> vector<2x8x8xf32>
    "tpu.trace_stop"() : () -> ()
    %cst_20 = arith.constant dense<0xFF800000> : vector<2x8xf32>
    %89 = vector.multi_reduction <maximumf>, %88, %cst_20 [2] : vector<2x8x8xf32> to vector<2x8xf32>
    %90 = vector.shape_cast %89 : vector<2x8xf32> to vector<2x8x1xf32>
    %91 = vector.broadcast %90 : vector<2x8x1xf32> to vector<2x8x8xf32>
    %92 = arith.subf %88, %91 : vector<2x8x8xf32>
    %93 = math.exp %92 : vector<2x8x8xf32>
    %cst_21 = arith.constant dense<0.000000e+00> : vector<2x8xf32>
    %94 = vector.multi_reduction <add>, %93, %cst_21 [2] : vector<2x8x8xf32> to vector<2x8xf32>
    %95 = vector.shape_cast %94 : vector<2x8xf32> to vector<2x8x1xf32>
    %96 = tpu.reciprocal %95 {approx = true} : vector<2x8x1xf32> -> vector<2x8x1xf32>
    %97 = vector.broadcast %96 : vector<2x8x1xf32> to vector<2x8x8xf32>
    %98 = arith.mulf %93, %97 : vector<2x8x8xf32>
    %99 = arith.truncf %98 : vector<2x8x8xf32> to vector<2x8x8xbf16>
    "tpu.trace_start"() <{level = 10 : i32, message = "bqk,bkd->bqd"}> : () -> ()
    %cst_22 = arith.constant dense<0.000000e+00> : vector<2x8x8xf32>
    %100 = tpu.matmul %99, %87, %cst_22 {dimension_numbers = #tpu.dot_dimension_numbers<[2], [1], [1], [2], [0, 0, 0, 1, 1, 2], [0], [0]>} : vector<2x8x8xbf16>, vector<2x8x8xbf16>, vector<2x8x8xf32> -> vector<2x8x8xf32>
    "tpu.trace_stop"() : () -> ()
    %101 = tpu.concatenate %34, %56, %78, %100 in 2 : vector<2x8x8xf32>, vector<2x8x8xf32>, vector<2x8x8xf32>, vector<2x8x8xf32> -> vector<2x8x32xf32>
    %102 = vector.shape_cast %101 : vector<2x8x32xf32> to vector<16x32xf32>
    %103 = arith.truncf %102 : vector<16x32xf32> to vector<16x32xbf16>
    %c0_23 = arith.constant 0 : index
    %c0_24 = arith.constant 0 : index
    %104 = vector.load %arg4[%c0_23, %c0_24] : memref<32x32xbf16, #tpu.memory_space<vmem>>, vector<32x32xbf16>
    %cst_25 = arith.constant dense<0.000000e+00> : vector<16x32xf32>
    %105 = tpu.matmul %103, %104, %cst_25 {dimension_numbers = #tpu.dot_dimension_numbers<[1], [0], [0], [1], [0, 0, 1, 1], [], []>} : vector<16x32xbf16>, vector<32x32xbf16>, vector<16x32xf32> -> vector<16x32xf32>
    %c0_26 = arith.constant 0 : index
    %c0_27 = arith.constant 0 : index
    %106 = vector.load %arg5[%c0_26, %c0_27] : memref<1x32xf32, #tpu.memory_space<vmem>>, vector<1x32xf32>
    %107 = vector.broadcast %106 : vector<1x32xf32> to vector<16x32xf32>
    %108 = arith.addf %105, %107 : vector<16x32xf32>
    %109 = vector.shape_cast %108 : vector<16x32xf32> to vector<2x8x32xf32>
    %c0_28 = arith.constant 0 : index
    %c0_29 = arith.constant 0 : index
    %c0_30 = arith.constant 0 : index
    %110 = vector.load %arg6[%c0_28, %c0_29, %c0_30] : memref<2x8x32xf32, #tpu.memory_space<vmem>>, vector<2x8x32xf32>
    tpu.vector_store %arg6[%c0_28, %c0_29, %c0_30], %109 {strides = array<i32>} : memref<2x8x32xf32, #tpu.memory_space<vmem>>, vector<2x8x32xf32>,
    return
  }
  func.func @transform_0(%arg0: i32) -> (i32, i32, i32) {
    %c0_i32 = arith.constant 0 : i32
    %c0_i32_0 = arith.constant 0 : i32
    %c0_i32_1 = arith.constant 0 : i32
    %c0_i32_2 = arith.constant 0 : i32
    return %c0_i32, %c0_i32_0, %c0_i32_1 : i32, i32, i32
  }
  func.func @transform_1(%arg0: i32) -> (i32, i32) {
    %c0_i32 = arith.constant 0 : i32
    %c0_i32_0 = arith.constant 0 : i32
    %c0_i32_1 = arith.constant 0 : i32
    return %c0_i32, %c0_i32_0 : i32, i32
  }
  func.func @transform_2(%arg0: i32) -> (i32, i32) {
    %c0_i32 = arith.constant 0 : i32
    %c0_i32_0 = arith.constant 0 : i32
    %c0_i32_1 = arith.constant 0 : i32
    return %c0_i32, %c0_i32_0 : i32, i32
  }
  func.func @transform_3(%arg0: i32) -> (i32, i32) {
    %c0_i32 = arith.constant 0 : i32
    %c0_i32_0 = arith.constant 0 : i32
    %c0_i32_1 = arith.constant 0 : i32
    return %c0_i32, %c0_i32_0 : i32, i32
  }
  func.func @transform_4(%arg0: i32) -> (i32, i32) {
    %c0_i32 = arith.constant 0 : i32
    %c0_i32_0 = arith.constant 0 : i32
    %c0_i32_1 = arith.constant 0 : i32
    return %c0_i32, %c0_i32_0 : i32, i32
  }
  func.func @transform_5(%arg0: i32) -> (i32, i32, i32) {
    %c0_i32 = arith.constant 0 : i32
    %c0_i32_0 = arith.constant 0 : i32
    %c0_i32_1 = arith.constant 0 : i32
    %c0_i32_2 = arith.constant 0 : i32
    return %c0_i32, %c0_i32_0, %c0_i32_1 : i32, i32, i32
  }
}

</mosaic_0001>

<llo_original>
// kernel: tpu_custom_call.1
$region0: #{tpu_custom_call.1}
  #allocation0 [shape = 'u32[]', space=smem, size = 0x4, offset = 0x4, fixed_abs, tag = 'smem constant byte address 0x4 - core index']
  #allocation1 [shape = 'u32[72,128]{1,0:T(1,128)}', space=vmem, size = 0x9000, scoped, tag = 'internal scratch']
  %s0 = inlined_call_operand.hbm [shape: f32[2,8,32], index: 0, kind: input, shape index: {}]
  %s1 = inlined_call_operand.hbm [shape: bf16[32,96], index: 1, kind: input, shape index: {}]
  %s2 = inlined_call_operand.vmem [shape: f32[1,96], index: 2, kind: input, shape index: {}]
  %s3 = inlined_call_operand.hbm [shape: bf16[32,32], index: 3, kind: input, shape index: {}]
  %s4 = inlined_call_operand.vmem [shape: f32[1,32], index: 4, kind: input, shape index: {}]
  %s5 = inlined_call_operand.hbm [shape: f32[2,8,32], index: 5, kind: output, shape index: {}]
  %s6 = sld [smem:[#allocation0]]
  $region42: #{tpu_custom_call.1} parent=0
    _
  %s8 = ssub.s32 1, %s6
  %s9 = scalar_select 0, %s8, %s6
  $region1: #{tpu_custom_call.1} parent=0
    #allocation2 [shape = 'u8[8192]{0}', space=vmem, size = 0x2000, scoped, tag = 'input window, operand 0, single buffered']
    #allocation3 [shape = 's32[1]{0}', space=sflag, size = 0x4, scoped, tag = 'scoped memory for tpu_custom_call.1']
    #allocation4 [shape = 's32[1]{0}', space=sflag, size = 0x4, scoped, tag = 'scoped memory for tpu_custom_call.1']
    #allocation5 [shape = 'u8[8192]{0}', space=vmem, size = 0x2000, scoped, tag = 'input window, operand 1, single buffered']
    #allocation6 [shape = 's32[1]{0}', space=sflag, size = 0x4, scoped, tag = 'scoped memory for tpu_custom_call.1']
    #allocation7 [shape = 'u8[8192]{0}', space=vmem, size = 0x2000, scoped, tag = 'input window, operand 3, single buffered']
    #allocation8 [shape = 'u8[8192]{0}', space=vmem, size = 0x2000, scoped, tag = 'output window, operand 0, single buffered']
    %10 = vsyncpa [#allocation3], 0
    %11 = vsyncpa [#allocation6], 0
    %12 = vsyncpa [#allocation4], 0
    // Predicated region
    $region2: #{tpu_custom_call.1} parent=1 // pred_check
      _
    $region3: #{tpu_custom_call.1} parent=1 // pred_check_branch
      %14 = sbr.rel (0) target = $region5
    $region4: #{tpu_custom_call.1} parent=1 // pred_region
      %16 = vsyncadd [#allocation3], 0
      %s17 = sshll.u32 %s0, 4
      %s18 = int_to_ptr.hbm [resolvable:$true] %s17
      %s19 = sshll.u32 [#allocation2], 4
      %s20 = int_to_ptr.vmem [resolvable:$true] %s19
      %25 = dma.hbm_to_vmem [thread:$0]  %s18, 256, %s20, [#allocation3], 128, 128, 8
    $region5: #{tpu_custom_call.1} parent=1 // pred_fallthru
      _
    // Predicated region
    $region6: #{tpu_custom_call.1} parent=1 // pred_check
      _
    $region7: #{tpu_custom_call.1} parent=1 // pred_check_branch
      %27 = sbr.rel (0) target = $region9
    $region8: #{tpu_custom_call.1} parent=1 // pred_region
      %29 = vsyncadd [#allocation6], 0
      %s30 = sshll.u32 %s1, 4
      %s31 = int_to_ptr.hbm [resolvable:$true] %s30
      %s32 = sshll.u32 [#allocation5], 4
      %s33 = int_to_ptr.vmem [resolvable:$true] %s32
      %38 = dma.hbm_to_vmem [thread:$0]  %s31, 256, %s33, [#allocation6], 64, 64, 4
    $region9: #{tpu_custom_call.1} parent=1 // pred_fallthru
      _
    // Predicated region
    $region10: #{tpu_custom_call.1} parent=1 // pred_check
      _
    $region11: #{tpu_custom_call.1} parent=1 // pred_check_branch
      %40 = sbr.rel (0) target = $region13
    $region12: #{tpu_custom_call.1} parent=1 // pred_region
      _
    $region13: #{tpu_custom_call.1} parent=1 // pred_fallthru
      _
    // Predicated region
    $region14: #{tpu_custom_call.1} parent=1 // pred_check
      _
    $region15: #{tpu_custom_call.1} parent=1 // pred_check_branch
      %42 = sbr.rel (0) target = $region17
    $region16: #{tpu_custom_call.1} parent=1 // pred_region
      %44 = vsyncadd [#allocation6], 0
      %s45 = sshll.u32 %s3, 4
      %s46 = int_to_ptr.hbm [resolvable:$true] %s45
      %s47 = sshll.u32 [#allocation7], 4
      %s48 = int_to_ptr.vmem [resolvable:$true] %s47
      %53 = dma.hbm_to_vmem [thread:$0]  %s46, 256, %s48, [#allocation6], 64, 64, 4
    $region17: #{tpu_custom_call.1} parent=1 // pred_fallthru
      _
    // Predicated region
    $region18: #{tpu_custom_call.1} parent=1 // pred_check
      _
    $region19: #{tpu_custom_call.1} parent=1 // pred_check_branch
      %55 = sbr.rel (0) target = $region21
    $region20: #{tpu_custom_call.1} parent=1 // pred_region
      _
    $region21: #{tpu_custom_call.1} parent=1 // pred_fallthru
      _
    // Predicated region
    $region22: #{tpu_custom_call.1} parent=1 // pred_check
      _
    $region23: #{tpu_custom_call.1} parent=1 // pred_check_branch
      %57 = sbr.rel (0) target = $region25
    $region24: #{tpu_custom_call.1} parent=1 // pred_region
      %59 = dma.done [#allocation3], 256
    $region25: #{tpu_custom_call.1} parent=1 // pred_fallthru
      _
    // Predicated region
    $region26: #{tpu_custom_call.1} parent=1 // pred_check
      _
    $region27: #{tpu_custom_call.1} parent=1 // pred_check_branch
      %61 = sbr.rel (0) target = $region29
    $region28: #{tpu_custom_call.1} parent=1 // pred_region
      %63 = dma.done [#allocation6], 256
    $region29: #{tpu_custom_call.1} parent=1 // pred_fallthru
      _
    // Predicated region
    $region30: #{tpu_custom_call.1} parent=1 // pred_check
      _
    $region31: #{tpu_custom_call.1} parent=1 // pred_check_branch
      %65 = sbr.rel (0) target = $region33
    $region32: #{tpu_custom_call.1} parent=1 // pred_region
      %67 = dma.done [#allocation6], 256
    $region33: #{tpu_custom_call.1} parent=1 // pred_fallthru
      _
    %v69 = vld [vmem:[#allocation2] sm:$0xff]
    %v70 = vld [vmem:[#allocation2 + $0x8] sm:$0xff]
    %v71 = vpack.c.bf16 %v70, %v69
    %v72 = vld [vmem:[#allocation5] sm:$0xf]
    %v73 = vld [vmem:[#allocation5 + $0x4] sm:$0xf]
    %v74 = vld [vmem:[#allocation5 + $0x8] sm:$0xf]
    %v75 = vld [vmem:[#allocation5 + $0xc] sm:$0xf]
    %v76 = vld [vmem:[%s2] sm:$0x1]
    %v78 = vperm.slane %v76, 0
    %v84 = vunpack.c.l.b16 %v72
    %v85 = vunpack.c.l.b16 %v73
    %v86 = vunpack.c.l.b16 %v74
    %v87 = vunpack.c.l.b16 %v75
    %v88 = vpack.c.b16 %v85, %v84
    %v89 = vpack.c.b16 %v87, %v86
    %vm92 = vcmask 261120
    %v94 = vsel %vm92, %v71, 0
    %96 = vmatpush.bf16.msra.mxu0 0
    %97 = vmatpush.bf16.msra.mxu0 0
    %98 = vmatpush.bf16.msra.mxu0 0
    %99 = vmatpush.bf16.msra.mxu0 0
    %100 = vmatpush.bf16.msra.mxu0 0
    %101 = vmatpush.bf16.msra.mxu0 0
    %102 = vmatpush.bf16.msra.mxu0 %v89
    %103 = vmatpush.bf16.msra.mxu0 %v88
    %104 = vmatmul.bf16.gmra.mxu0 %v94
    %v105 = vpop.f32.mrf.mxu0
    %v106 = vadd.f32 %v78, %v105
    %v107 = vpop.f32.mrf.mxu0
    %v108 = vadd.f32 %v78, %v107
    %109 = vdwg.mxu0
    %v110 = vmul.f32 %v106, 0.35355338
    %v111 = vmul.f32 %v108, 0.35355338
    %v112 = vpack.c.bf16 %v110, %v110
    %v113 = vpack.c.bf16 %v111, %v111
    %v114 = vpack.c.bf16 %v106, %v106
    %v115 = vpack.c.bf16 %v108, %v108
    %v117 = vunpack.c.l.b16 %v114
    %v118 = vpack.c.b16 %v117, %v117
    %119 = vrot.lane.b32.xlu0 %v118, 96
    %v120 = vpop.permute.xlu0 %119
    %vm121 = vcmask 64512
    %v123 = vsel %vm121, %v112, 0
    %v126 = vsel %vm121, %v120, 0
    %128 = vmatpush.bf16.xpose.msra.mxu0 0
    %129 = vmatpush.bf16.xpose.msra.mxu0 0
    %130 = vmatpush.bf16.xpose.msra.mxu0 0
    %131 = vmatpush.bf16.xpose.msra.mxu0 0
    %132 = vmatpush.bf16.xpose.msra.mxu0 0
    %133 = vmatpush.bf16.xpose.msra.mxu0 0
    %134 = vmatpush.bf16.xpose.msra.mxu0 0
    %135 = vmatpush.bf16.xpose.msra.mxu0 %v126
    %136 = vmatmul.bf16.gmra.mxu0 %v123
    %v137 = vpop.f32.mrf.mxu0
    %v138 = vadd.f32 0.0, %v137
    %v139 = vpop.f32.mrf.mxu0
    %140 = vdwg.mxu0
    %v142 = vunpack.c.l.b16 %v115
    %v143 = vpack.c.b16 %v142, %v142
    %144 = vrot.lane.b32.xlu0 %v143, 96
    %v145 = vpop.permute.xlu0 %144
    %v147 = vsel %vm121, %v113, 0
    %v150 = vsel %vm121, %v145, 0
    %152 = vmatpush.bf16.xpose.msra.mxu0 0
    %153 = vmatpush.bf16.xpose.msra.mxu0 0
    %154 = vmatpush.bf16.xpose.msra.mxu0 0
    %155 = vmatpush.bf16.xpose.msra.mxu0 0
    %156 = vmatpush.bf16.xpose.msra.mxu0 0
    %157 = vmatpush.bf16.xpose.msra.mxu0 0
    %158 = vmatpush.bf16.xpose.msra.mxu0 0
    %159 = vmatpush.bf16.xpose.msra.mxu0 %v150
    %160 = vmatmul.bf16.gmra.mxu0 %v147
    %v161 = vpop.f32.mrf.mxu0
    %v162 = vadd.f32 0.0, %v161
    %v163 = vpop.f32.mrf.mxu0
    %164 = vdwg.mxu0
    %v165 = vsel %vm121, %v138, -inf
    %166 = vmax.xlane.f32.xlu0 %v165
    %v167 = vpop.xlane.xlu0 %166
    %v168 = vsel %vm121, %v162, -inf
    %169 = vmax.xlane.f32.xlu0 %v168
    %v170 = vpop.xlane.xlu0 %169
    %v171 = vsub.f32 %v138, %v167
    %v172 = vsub.f32 %v162, %v170
    %v173 = vmul.f32 %v171, 1.442695
    %v174 = vpow.pop %v173
    %v175 = vmul.f32 %v172, 1.442695
    %v176 = vpow.pop %v175
    %v177 = vsel %vm121, %v174, 0.0
    %178 = vadd.xlane.f32.xlu0 %v177
    %v179 = vpop.xlane.xlu0 %178
    %v180 = vsel %vm121, %v176, 0.0
    %181 = vadd.xlane.f32.xlu0 %v180
    %v182 = vpop.xlane.xlu0 %181
    %v183 = vrcp.pop %v179
    %v184 = vrcp.pop %v182
    %v185 = vmul.f32 %v174, %v183
    %v186 = vmul.f32 %v176, %v184
    %v187 = vpack.c.bf16 %v185, %v185
    %v188 = vpack.c.bf16 %v186, %v186
    %189 = vrot.lane.b32.xlu0 %v118, 64
    %v190 = vpop.permute.xlu0 %189
    %v192 = vsel %vm121, %v187, 0
    %vm194 = vcmask 1043456
    %v196 = vsel %vm194, %v190, 0
    %198 = vmatpush.bf16.msra.mxu0 0
    %199 = vmatpush.bf16.msra.mxu0 0
    %200 = vmatpush.bf16.msra.mxu0 0
    %201 = vmatpush.bf16.msra.mxu0 0
    %202 = vmatpush.bf16.msra.mxu0 0
    %203 = vmatpush.bf16.msra.mxu0 0
    %204 = vmatpush.bf16.msra.mxu0 0
    %205 = vmatpush.bf16.msra.mxu0 %v196
    %206 = vmatmul.bf16.gmra.mxu0 %v192
    %v207 = vpop.f32.mrf.mxu0
    %v208 = vadd.f32 0.0, %v207
    %v209 = vpop.f32.mrf.mxu0
    %210 = vdwg.mxu0
    %211 = vrot.lane.b32.xlu0 %v143, 64
    %v212 = vpop.permute.xlu0 %211
    %v214 = vsel %vm121, %v188, 0
    %v217 = vsel %vm194, %v212, 0
    %219 = vmatpush.bf16.msra.mxu0 0
    %220 = vmatpush.bf16.msra.mxu0 0
    %221 = vmatpush.bf16.msra.mxu0 0
    %222 = vmatpush.bf16.msra.mxu0 0
    %223 = vmatpush.bf16.msra.mxu0 0
    %224 = vmatpush.bf16.msra.mxu0 0
    %225 = vmatpush.bf16.msra.mxu0 0
    %226 = vmatpush.bf16.msra.mxu0 %v217
    %227 = vmatmul.bf16.gmra.mxu0 %v214
    %v228 = vpop.f32.mrf.mxu0
    %v229 = vadd.f32 0.0, %v228
    %v230 = vpop.f32.mrf.mxu0
    %231 = vdwg.mxu0
    %v233 = vunpack.c.l.b16 %v112
    %v234 = vpack.c.b16 %v233, %v233
    %235 = vrot.lane.b32.xlu0 %v234, 120
    %v236 = vpop.permute.xlu0 %235
    %237 = vrot.lane.b32.xlu0 %v118, 88
    %v238 = vpop.permute.xlu0 %237
    %v240 = vsel %vm121, %v236, 0
    %v243 = vsel %vm121, %v238, 0
    %245 = vmatpush.bf16.xpose.msra.mxu0 0
    %246 = vmatpush.bf16.xpose.msra.mxu0 0
    %247 = vmatpush.bf16.xpose.msra.mxu0 0
    %248 = vmatpush.bf16.xpose.msra.mxu0 0
    %249 = vmatpush.bf16.xpose.msra.mxu0 0
    %250 = vmatpush.bf16.xpose.msra.mxu0 0
    %251 = vmatpush.bf16.xpose.msra.mxu0 0
    %252 = vmatpush.bf16.xpose.msra.mxu0 %v243
    %253 = vmatmul.bf16.gmra.mxu0 %v240
    %v254 = vpop.f32.mrf.mxu0
    %v255 = vadd.f32 0.0, %v254
    %v256 = vpop.f32.mrf.mxu0
    %257 = vdwg.mxu0
    %v259 = vunpack.c.l.b16 %v113
    %v260 = vpack.c.b16 %v259, %v259
    %261 = vrot.lane.b32.xlu0 %v260, 120
    %v262 = vpop.permute.xlu0 %261
    %263 = vrot.lane.b32.xlu0 %v143, 88
    %v264 = vpop.permute.xlu0 %263
    %v266 = vsel %vm121, %v262, 0
    %v269 = vsel %vm121, %v264, 0
    %271 = vmatpush.bf16.xpose.msra.mxu0 0
    %272 = vmatpush.bf16.xpose.msra.mxu0 0
    %273 = vmatpush.bf16.xpose.msra.mxu0 0
    %274 = vmatpush.bf16.xpose.msra.mxu0 0
    %275 = vmatpush.bf16.xpose.msra.mxu0 0
    %276 = vmatpush.bf16.xpose.msra.mxu0 0
    %277 = vmatpush.bf16.xpose.msra.mxu0 0
    %278 = vmatpush.bf16.xpose.msra.mxu0 %v269
    %279 = vmatmul.bf16.gmra.mxu0 %v266
    %v280 = vpop.f32.mrf.mxu0
    %v281 = vadd.f32 0.0, %v280
    %v282 = vpop.f32.mrf.mxu0
    %283 = vdwg.mxu0
    %v284 = vsel %vm121, %v255, -inf
    %285 = vmax.xlane.f32.xlu0 %v284
    %v286 = vpop.xlane.xlu0 %285
    %v287 = vsel %vm121, %v281, -inf
    %288 = vmax.xlane.f32.xlu0 %v287
    %v289 = vpop.xlane.xlu0 %288
    %v290 = vsub.f32 %v255, %v286
    %v291 = vsub.f32 %v281, %v289
    %v292 = vmul.f32 %v290, 1.442695
    %v293 = vpow.pop %v292
    %v294 = vmul.f32 %v291, 1.442695
    %v295 = vpow.pop %v294
    %v296 = vsel %vm121, %v293, 0.0
    %297 = vadd.xlane.f32.xlu0 %v296
    %v298 = vpop.xlane.xlu0 %297
    %v299 = vsel %vm121, %v295, 0.0
    %300 = vadd.xlane.f32.xlu0 %v299
    %v301 = vpop.xlane.xlu0 %300
    %v302 = vrcp.pop %v298
    %v303 = vrcp.pop %v301
    %v304 = vmul.f32 %v293, %v302
    %v305 = vmul.f32 %v295, %v303
    %v306 = vpack.c.bf16 %v304, %v304
    %v307 = vpack.c.bf16 %v305, %v305
    %308 = vrot.lane.b32.xlu0 %v118, 56
    %v309 = vpop.permute.xlu0 %308
    %v311 = vsel %vm121, %v306, 0
    %v314 = vsel %vm194, %v309, 0
    %316 = vmatpush.bf16.msra.mxu0 0
    %317 = vmatpush.bf16.msra.mxu0 0
    %318 = vmatpush.bf16.msra.mxu0 0
    %319 = vmatpush.bf16.msra.mxu0 0
    %320 = vmatpush.bf16.msra.mxu0 0
    %321 = vmatpush.bf16.msra.mxu0 0
    %322 = vmatpush.bf16.msra.mxu0 0
    %323 = vmatpush.bf16.msra.mxu0 %v314
    %324 = vmatmul.bf16.gmra.mxu0 %v311
    %v325 = vpop.f32.mrf.mxu0
    %v326 = vadd.f32 0.0, %v325
    %v327 = vpop.f32.mrf.mxu0
    %328 = vdwg.mxu0
    %329 = vrot.lane.b32.xlu0 %v143, 56
    %v330 = vpop.permute.xlu0 %329
    %v332 = vsel %vm121, %v307, 0
    %v335 = vsel %vm194, %v330, 0
    %337 = vmatpush.bf16.msra.mxu0 0
    %338 = vmatpush.bf16.msra.mxu0 0
    %339 = vmatpush.bf16.msra.mxu0 0
    %340 = vmatpush.bf16.msra.mxu0 0
    %341 = vmatpush.bf16.msra.mxu0 0
    %342 = vmatpush.bf16.msra.mxu0 0
    %343 = vmatpush.bf16.msra.mxu0 0
    %344 = vmatpush.bf16.msra.mxu0 %v335
    %345 = vmatmul.bf16.gmra.mxu0 %v332
    %v346 = vpop.f32.mrf.mxu0
    %v347 = vadd.f32 0.0, %v346
    %v348 = vpop.f32.mrf.mxu0
    %349 = vdwg.mxu0
    %350 = vrot.lane.b32.xlu0 %v234, 112
    %v351 = vpop.permute.xlu0 %350
    %352 = vrot.lane.b32.xlu0 %v118, 80
    %v353 = vpop.permute.xlu0 %352
    %v355 = vsel %vm121, %v351, 0
    %v358 = vsel %vm121, %v353, 0
    %360 = vmatpush.bf16.xpose.msra.mxu0 0
    %361 = vmatpush.bf16.xpose.msra.mxu0 0
    %362 = vmatpush.bf16.xpose.msra.mxu0 0
    %363 = vmatpush.bf16.xpose.msra.mxu0 0
    %364 = vmatpush.bf16.xpose.msra.mxu0 0
    %365 = vmatpush.bf16.xpose.msra.mxu0 0
    %366 = vmatpush.bf16.xpose.msra.mxu0 0
    %367 = vmatpush.bf16.xpose.msra.mxu0 %v358
    %368 = vmatmul.bf16.gmra.mxu0 %v355
    %v369 = vpop.f32.mrf.mxu0
    %v370 = vadd.f32 0.0, %v369
    %v371 = vpop.f32.mrf.mxu0
    %372 = vdwg.mxu0
    %373 = vrot.lane.b32.xlu0 %v260, 112
    %v374 = vpop.permute.xlu0 %373
    %375 = vrot.lane.b32.xlu0 %v143, 80
    %v376 = vpop.permute.xlu0 %375
    %v378 = vsel %vm121, %v374, 0
    %v381 = vsel %vm121, %v376, 0
    %383 = vmatpush.bf16.xpose.msra.mxu0 0
    %384 = vmatpush.bf16.xpose.msra.mxu0 0
    %385 = vmatpush.bf16.xpose.msra.mxu0 0
    %386 = vmatpush.bf16.xpose.msra.mxu0 0
    %387 = vmatpush.bf16.xpose.msra.mxu0 0
    %388 = vmatpush.bf16.xpose.msra.mxu0 0
    %389 = vmatpush.bf16.xpose.msra.mxu0 0
    %390 = vmatpush.bf16.xpose.msra.mxu0 %v381
    %391 = vmatmul.bf16.gmra.mxu0 %v378
    %v392 = vpop.f32.mrf.mxu0
    %v393 = vadd.f32 0.0, %v392
    %v394 = vpop.f32.mrf.mxu0
    %395 = vdwg.mxu0
    %v396 = vsel %vm121, %v370, -inf
    %397 = vmax.xlane.f32.xlu0 %v396
    %v398 = vpop.xlane.xlu0 %397
    %v399 = vsel %vm121, %v393, -inf
    %400 = vmax.xlane.f32.xlu0 %v399
    %v401 = vpop.xlane.xlu0 %400
    %v402 = vsub.f32 %v370, %v398
    %v403 = vsub.f32 %v393, %v401
    %v404 = vmul.f32 %v402, 1.442695
    %v405 = vpow.pop %v404
    %v406 = vmul.f32 %v403, 1.442695
    %v407 = vpow.pop %v406
    %v408 = vsel %vm121, %v405, 0.0
    %409 = vadd.xlane.f32.xlu0 %v408
    %v410 = vpop.xlane.xlu0 %409
    %v411 = vsel %vm121, %v407, 0.0
    %412 = vadd.xlane.f32.xlu0 %v411
    %v413 = vpop.xlane.xlu0 %412
    %v414 = vrcp.pop %v410
    %v415 = vrcp.pop %v413
    %v416 = vmul.f32 %v405, %v414
    %v417 = vmul.f32 %v407, %v415
    %v418 = vpack.c.bf16 %v416, %v416
    %v419 = vpack.c.bf16 %v417, %v417
    %420 = vrot.lane.b32.xlu0 %v118, 48
    %v421 = vpop.permute.xlu0 %420
    %v423 = vsel %vm121, %v418, 0
    %v426 = vsel %vm194, %v421, 0
    %428 = vmatpush.bf16.msra.mxu0 0
    %429 = vmatpush.bf16.msra.mxu0 0
    %430 = vmatpush.bf16.msra.mxu0 0
    %431 = vmatpush.bf16.msra.mxu0 0
    %432 = vmatpush.bf16.msra.mxu0 0
    %433 = vmatpush.bf16.msra.mxu0 0
    %434 = vmatpush.bf16.msra.mxu0 0
    %435 = vmatpush.bf16.msra.mxu0 %v426
    %436 = vmatmul.bf16.gmra.mxu0 %v423
    %v437 = vpop.f32.mrf.mxu0
    %v438 = vadd.f32 0.0, %v437
    %v439 = vpop.f32.mrf.mxu0
    %440 = vdwg.mxu0
    %441 = vrot.lane.b32.xlu0 %v143, 48
    %v442 = vpop.permute.xlu0 %441
    %v444 = vsel %vm121, %v419, 0
    %v447 = vsel %vm194, %v442, 0
    %449 = vmatpush.bf16.msra.mxu0 0
    %450 = vmatpush.bf16.msra.mxu0 0
    %451 = vmatpush.bf16.msra.mxu0 0
    %452 = vmatpush.bf16.msra.mxu0 0
    %453 = vmatpush.bf16.msra.mxu0 0
    %454 = vmatpush.bf16.msra.mxu0 0
    %455 = vmatpush.bf16.msra.mxu0 0
    %456 = vmatpush.bf16.msra.mxu0 %v447
    %457 = vmatmul.bf16.gmra.mxu0 %v444
    %v458 = vpop.f32.mrf.mxu0
    %v459 = vadd.f32 0.0, %v458
    %v460 = vpop.f32.mrf.mxu0
    %461 = vdwg.mxu0
    %462 = vrot.lane.b32.xlu0 %v234, 104
    %v463 = vpop.permute.xlu0 %462
    %464 = vrot.lane.b32.xlu0 %v118, 72
    %v465 = vpop.permute.xlu0 %464
    %v467 = vsel %vm121, %v463, 0
    %v470 = vsel %vm121, %v465, 0
    %472 = vmatpush.bf16.xpose.msra.mxu0 0
    %473 = vmatpush.bf16.xpose.msra.mxu0 0
    %474 = vmatpush.bf16.xpose.msra.mxu0 0
    %475 = vmatpush.bf16.xpose.msra.mxu0 0
    %476 = vmatpush.bf16.xpose.msra.mxu0 0
    %477 = vmatpush.bf16.xpose.msra.mxu0 0
    %478 = vmatpush.bf16.xpose.msra.mxu0 0
    %479 = vmatpush.bf16.xpose.msra.mxu0 %v470
    %480 = vmatmul.bf16.gmra.mxu0 %v467
    %v481 = vpop.f32.mrf.mxu0
    %v482 = vadd.f32 0.0, %v481
    %v483 = vpop.f32.mrf.mxu0
    %484 = vdwg.mxu0
    %485 = vrot.lane.b32.xlu0 %v260, 104
    %v486 = vpop.permute.xlu0 %485
    %487 = vrot.lane.b32.xlu0 %v143, 72
    %v488 = vpop.permute.xlu0 %487
    %v490 = vsel %vm121, %v486, 0
    %v493 = vsel %vm121, %v488, 0
    %495 = vmatpush.bf16.xpose.msra.mxu0 0
    %496 = vmatpush.bf16.xpose.msra.mxu0 0
    %497 = vmatpush.bf16.xpose.msra.mxu0 0
    %498 = vmatpush.bf16.xpose.msra.mxu0 0
    %499 = vmatpush.bf16.xpose.msra.mxu0 0
    %500 = vmatpush.bf16.xpose.msra.mxu0 0
    %501 = vmatpush.bf16.xpose.msra.mxu0 0
    %502 = vmatpush.bf16.xpose.msra.mxu0 %v493
    %503 = vmatmul.bf16.gmra.mxu0 %v490
    %v504 = vpop.f32.mrf.mxu0
    %v505 = vadd.f32 0.0, %v504
    %v506 = vpop.f32.mrf.mxu0
    %507 = vdwg.mxu0
    %v508 = vsel %vm121, %v482, -inf
    %509 = vmax.xlane.f32.xlu0 %v508
    %v510 = vpop.xlane.xlu0 %509
    %v511 = vsel %vm121, %v505, -inf
    %512 = vmax.xlane.f32.xlu0 %v511
    %v513 = vpop.xlane.xlu0 %512
    %v514 = vsub.f32 %v482, %v510
    %v515 = vsub.f32 %v505, %v513
    %v516 = vmul.f32 %v514, 1.442695
    %v517 = vpow.pop %v516
    %v518 = vmul.f32 %v515, 1.442695
    %v519 = vpow.pop %v518
    %v520 = vsel %vm121, %v517, 0.0
    %521 = vadd.xlane.f32.xlu0 %v520
    %v522 = vpop.xlane.xlu0 %521
    %v523 = vsel %vm121, %v519, 0.0
    %524 = vadd.xlane.f32.xlu0 %v523
    %v525 = vpop.xlane.xlu0 %524
    %v526 = vrcp.pop %v522
    %v527 = vrcp.pop %v525
    %v528 = vmul.f32 %v517, %v526
    %v529 = vmul.f32 %v519, %v527
    %v530 = vpack.c.bf16 %v528, %v528
    %v531 = vpack.c.bf16 %v529, %v529
    %532 = vrot.lane.b32.xlu0 %v118, 40
    %v533 = vpop.permute.xlu0 %532
    %v535 = vsel %vm121, %v530, 0
    %v538 = vsel %vm194, %v533, 0
    %540 = vmatpush.bf16.msra.mxu0 0
    %541 = vmatpush.bf16.msra.mxu0 0
    %542 = vmatpush.bf16.msra.mxu0 0
    %543 = vmatpush.bf16.msra.mxu0 0
    %544 = vmatpush.bf16.msra.mxu0 0
    %545 = vmatpush.bf16.msra.mxu0 0
    %546 = vmatpush.bf16.msra.mxu0 0
    %547 = vmatpush.bf16.msra.mxu0 %v538
    %548 = vmatmul.bf16.gmra.mxu0 %v535
    %v549 = vpop.f32.mrf.mxu0
    %v550 = vadd.f32 0.0, %v549
    %v551 = vpop.f32.mrf.mxu0
    %552 = vdwg.mxu0
    %553 = vrot.lane.b32.xlu0 %v143, 40
    %v554 = vpop.permute.xlu0 %553
    %v556 = vsel %vm121, %v531, 0
    %v559 = vsel %vm194, %v554, 0
    %561 = vmatpush.bf16.msra.mxu0 0
    %562 = vmatpush.bf16.msra.mxu0 0
    %563 = vmatpush.bf16.msra.mxu0 0
    %564 = vmatpush.bf16.msra.mxu0 0
    %565 = vmatpush.bf16.msra.mxu0 0
    %566 = vmatpush.bf16.msra.mxu0 0
    %567 = vmatpush.bf16.msra.mxu0 0
    %568 = vmatpush.bf16.msra.mxu0 %v559
    %569 = vmatmul.bf16.gmra.mxu0 %v556
    %v570 = vpop.f32.mrf.mxu0
    %v571 = vadd.f32 0.0, %v570
    %v572 = vpop.f32.mrf.mxu0
    %573 = vdwg.mxu0
    %576 = vrot.lane.b32.xlu0 %v326, 8
    %v577 = vpop.permute.xlu0 %576
    %578 = vrot.lane.b32.xlu0 %v347, 8
    %v579 = vpop.permute.xlu0 %578
    %584 = vrot.lane.b32.xlu0 %v438, 16
    %v585 = vpop.permute.xlu0 %584
    %586 = vrot.lane.b32.xlu0 %v459, 16
    %v587 = vpop.permute.xlu0 %586
    %592 = vrot.lane.b32.xlu0 %v550, 24
    %v593 = vpop.permute.xlu0 %592
    %594 = vrot.lane.b32.xlu0 %v571, 24
    %v595 = vpop.permute.xlu0 %594
    %v598 = vsel %vm121, %v208, %v577
    %v599 = vsel %vm121, %v229, %v579
    %vm600 = vcmask 130048
    %v601 = vsel %vm600, %v598, %v585
    %v602 = vsel %vm600, %v599, %v587
    %vm603 = vcmask 195584
    %v604 = vsel %vm603, %v601, %v593
    %v605 = vsel %vm603, %v602, %v595
    %v606 = vpack.c.bf16 %v605, %v604
    %v607 = vld [vmem:[#allocation7] sm:$0xf]
    %v608 = vld [vmem:[#allocation7 + $0x4] sm:$0xf]
    %v609 = vld [vmem:[#allocation7 + $0x8] sm:$0xf]
    %v610 = vld [vmem:[#allocation7 + $0xc] sm:$0xf]
    %v611 = vld [vmem:[%s4] sm:$0x1]
    %v613 = vperm.slane %v611, 0
    %v619 = vunpack.c.l.b16 %v607
    %v620 = vunpack.c.l.b16 %v608
    %v621 = vunpack.c.l.b16 %v609
    %v622 = vunpack.c.l.b16 %v610
    %v623 = vpack.c.b16 %v620, %v619
    %v624 = vpack.c.b16 %v622, %v621
    %v628 = vsel %vm92, %v606, 0
    %630 = vmatpush.bf16.msra.mxu0 0
    %631 = vmatpush.bf16.msra.mxu0 0
    %632 = vmatpush.bf16.msra.mxu0 0
    %633 = vmatpush.bf16.msra.mxu0 0
    %634 = vmatpush.bf16.msra.mxu0 0
    %635 = vmatpush.bf16.msra.mxu0 0
    %636 = vmatpush.bf16.msra.mxu0 %v624
    %637 = vmatpush.bf16.msra.mxu0 %v623
    %638 = vmatmul.bf16.gmra.mxu0 %v628
    %v639 = vpop.f32.mrf.mxu0
    %v640 = vadd.f32 %v613, %v639
    %v641 = vpop.f32.mrf.mxu0
    %v642 = vadd.f32 %v613, %v641
    %643 = vdwg.mxu0
    %644 = vst.msk [vmem:[#allocation8] sm:$0xff] %vm92, %v640
    %645 = vst.msk [vmem:[#allocation8 + $0x8] sm:$0xff] %vm92, %v642
    // Predicated region
    $region34: #{tpu_custom_call.1} parent=1 // pred_check
      _
    $region35: #{tpu_custom_call.1} parent=1 // pred_check_branch
      %647 = sbr.rel (0) target = $region37
    $region36: #{tpu_custom_call.1} parent=1 // pred_region
      %649 = vsyncadd [#allocation4], 0
      %s650 = sshll.u32 [#allocation8], 4
      %s651 = int_to_ptr.vmem [resolvable:$true] %s650
      %s652 = sshll.u32 %s5, 4
      %s653 = int_to_ptr.hbm [resolvable:$true] %s652
      %658 = dma.vmem_to_hbm [thread:$0]  %s651, 256, %s653, [#allocation4], 128, 128, 8
    $region37: #{tpu_custom_call.1} parent=1 // pred_fallthru
      _
    // Predicated region
    $region38: #{tpu_custom_call.1} parent=1 // pred_check
      _
    $region39: #{tpu_custom_call.1} parent=1 // pred_check_branch
      %660 = sbr.rel (0) target = $region41
    $region40: #{tpu_custom_call.1} parent=1 // pred_region
      %662 = dma.done [#allocation4], 256
    $region41: #{tpu_custom_call.1} parent=1 // pred_fallthru
      _
    %663 = vsyncpa [#allocation3], 1
    %664 = vsyncpa [#allocation6], 1
    %665 = vsyncpa [#allocation4], 1

</llo_original>
